<compile_context>
chip_gen: v7x
topology: tpu7x:2x2x1
jax: 0.10.0
libtpu: 0.0.40
codegen_flags: <defaults>
</compile_context>

<pallas_src>
import jax
import jax.numpy as jnp
from jax.experimental import pallas as pl
from jax.experimental.pallas import tpu as pltpu


def _round_up(x: int, m: int) -> int:
    return ((x + m - 1) // m) * m


# -----------------------------------------------------------------------------
# Kernel: one (TB, TH) output tile = x_tile (TB, D) @ W_tile (TH, D)^T + b_tile.
# -----------------------------------------------------------------------------
def _speaker_kernel(x_ref, w_ref, b_ref, o_ref):
    x = x_ref[...]                       # (TB, D)  compute dtype (bf16)
    w = w_ref[...]                       # (TH, D)  compute dtype (weight_norm folded in)
    b = b_ref[...]                       # (1,  TH) f32 bias

    # z = x @ W.T  -- contract the last dims of both operands (no transpose).
    z = jax.lax.dot_general(
        x, w,
        dimension_numbers=(((1,), (1,)), ((), ())),
        preferred_element_type=jnp.float32,
    )                                    # (TB, TH) f32
    z = z + b

    # Softsign: z / (1 + |z|), with the reciprocal pushed to the EUP slot.
    y = z * pl.reciprocal(1.0 + jnp.abs(z), approx=True)
    o_ref[...] = y.astype(o_ref.dtype)


# -----------------------------------------------------------------------------
# One-time weight prepack: fold weight_norm, cast, pad.  Reuse across calls.
# -----------------------------------------------------------------------------
def prepack_speaker_weights(v, g, b, *, compute_dtype=jnp.bfloat16):
    """v: (H, D) weight_norm direction, g: (H,) gain, b: (H,) bias."""
    H, D = v.shape

    # Fold the weight_norm row scale into W in f32, then cast once.
    v32 = v.astype(jnp.float32)
    s = g.astype(jnp.float32) * jax.lax.rsqrt(jnp.sum(v32 * v32, axis=1))   # (H,)
    w32 = v32 * s[:, None]                                                  # (H, D) f32

    # Lane-dense output columns; prefer >= 2 H-steps so both v7x TCs engage.
    Hr = _round_up(H, 128)
    if Hr % 256 == 0 and Hr // 256 >= 2:
        TH = 256
    elif Hr // 128 >= 2:
        TH = 128
    else:
        TH = Hr
    Hp = _round_up(Hr, TH)

    if Hp == H:
        wp = w32.astype(compute_dtype)
        bp = b.astype(jnp.float32).reshape(1, H)
    else:
        # Padded rows of W are 0 and padded bias is 0 -> padded outputs are
        # softsign(0) = 0, sliced off in the wrapper.
        wp = jnp.zeros((Hp, D), compute_dtype).at[:H, :].set(w32.astype(compute_dtype))
        bp = jnp.zeros((1, Hp), jnp.float32).at[0, :H].set(b.astype(jnp.float32))

    return {
        "w": wp, "b": bp,
        "H": H, "D": D, "Hp": Hp, "TH": TH,
        "compute_dtype": compute_dtype,
    }


# -----------------------------------------------------------------------------
# Per-call forward: only touches x.
# -----------------------------------------------------------------------------
def speaker_forward(x, packed, *, out_dtype=jnp.float32):
    """x: (B, speaker_embedding_dim) -> (B, hidden_dim)."""
    B, D = x.shape
    assert D == packed["D"], "speaker_embedding_dim mismatch with packed weights"
    cdt = packed["compute_dtype"]
    H, Hp, TH = packed["H"], packed["Hp"], packed["TH"]

    sub = 16 if cdt == jnp.bfloat16 else 8
    TB = min(512, _round_up(B, sub))
    Bp = _round_up(B, TB)

    xc = x.astype(cdt)
    if Bp == B:
        xp = xc                                  # fast path: no per-call padding
    else:
        xp = jnp.zeros((Bp, D), cdt).at[:B, :].set(xc)

    grid = (Bp // TB, Hp // TH)
    in_itemsize = jnp.dtype(cdt).itemsize
    out_itemsize = jnp.dtype(out_dtype).itemsize

    out = pl.pallas_call(
        _speaker_kernel,
        out_shape=jax.ShapeDtypeStruct((Bp, Hp), out_dtype),
        grid_spec=pl.GridSpec(
            grid=grid,
            in_specs=[
                pl.BlockSpec((TB, D), lambda i, j: (i, 0)),   # x     tile over B
                pl.BlockSpec((TH, D), lambda i, j: (j, 0)),   # W     tile over H
                pl.BlockSpec((1, TH), lambda i, j: (0, j)),   # bias  tile over H
            ],
            out_specs=pl.BlockSpec((TB, TH), lambda i, j: (i, j)),
        ),
        compiler_params=pltpu.CompilerParams(
            dimension_semantics=("parallel", "parallel"),
            vmem_limit_bytes=32 * 1024 * 1024,
        ),
        cost_estimate=pl.CostEstimate(
            flops=2 * Bp * Hp * D,
            transcendentals=Bp * Hp,
            bytes_accessed=(Bp * D + (Bp // TB) * Hp * D) * in_itemsize
                           + Hp * 4 + Bp * Hp * out_itemsize,
        ),
    )(xp, packed["w"], packed["b"])

    if Bp != B or Hp != H:
        out = out[:B, :H]
    return out


# -----------------------------------------------------------------------------
# References
# -----------------------------------------------------------------------------
def _reference_f32(x, v, g, b):
    # pure-JAX f32 reference of weight_norm Linear + softsign
    w = g[:, None] * v / jnp.sqrt(jnp.sum(v * v, axis=1, keepdims=True))
    z = x @ w.T + b[None, :]
    return z / (1.0 + jnp.abs(z))


def _reference_matched(x, v, g, b, compute_dtype):
    # reference with the same precision split as the kernel
    # (f32 fold of weight_norm into W, bf16 matmul operands, f32 accumulation),
    # exact divide for softsign.
    v32 = v.astype(jnp.float32)
    s = g.astype(jnp.float32) * jax.lax.rsqrt(jnp.sum(v32 * v32, axis=1))
    w = (v32 * s[:, None]).astype(compute_dtype)
    z = jax.lax.dot_general(
        x.astype(compute_dtype), w,
        dimension_numbers=(((1,), (1,)), ((), ())),
        preferred_element_type=jnp.float32,
    )
    z = z + b[None, :].astype(jnp.float32)
    return z / (1.0 + jnp.abs(z))


if __name__ == "__main__":
    # Small, deterministic shapes consistent with the module:
    #   speaker_embedding: (B, speaker_embedding_dim) -> output (B, hidden_dim)
    # Note: at shapes this tiny a standalone kernel can't amortize launch
    # overhead (dispatch policy could fall back to plain XLA); used here to
    # exercise the kernel path.
    B, D, H = 2, 16, 32
    key = jax.random.PRNGKey(0)
    kx, kv, kg, kb = jax.random.split(key, 4)

    x = jax.random.normal(kx, (B, D), dtype=jnp.float32)   # speaker embeddings
    v = jax.random.normal(kv, (H, D), dtype=jnp.float32)   # weight_norm V (nn.Linear.weight)
    g = jax.random.normal(kg, (H,), dtype=jnp.float32)     # weight_norm gain g
    bias = jax.random.normal(kb, (H,), dtype=jnp.float32)  # Linear bias

    packed = prepack_speaker_weights(v, g, bias)            # one-time weight pack
    out = speaker_forward(x, packed)
    out = jax.block_until_ready(out)
    assert out.shape == (B, H)

    # Check against a reference with the same precision split (allowing for the
    # approx-EUP reciprocal in the softsign).
    ref_m = _reference_matched(x, v, g, bias, jnp.bfloat16)
    assert jnp.allclose(out, ref_m, atol=1e-2, rtol=1e-2), "mismatch vs matched reference"

    # Loose check against the full-f32 reference (bf16 matmul operands).
    ref = _reference_f32(x, v, g, bias)
    assert jnp.allclose(out, ref, atol=5e-2, rtol=5e-2), "mismatch vs f32 reference"

    print("KERNEL_OK")
</pallas_src>

<mosaic_0001>
module attributes {stable_mosaic.version = 11 : i64} {
  func.func @_speaker_kernel(%arg0: i32, %arg1: i32, %arg2: memref<16x16xbf16, #tpu.memory_space<vmem>>, %arg3: memref<128x16xbf16, #tpu.memory_space<vmem>>, %arg4: memref<1x128xf32, #tpu.memory_space<vmem>>, %arg5: memref<16x128xf32, #tpu.memory_space<vmem>>) attributes {dimension_semantics = [#tpu.dimension_semantics<parallel>, #tpu.dimension_semantics<parallel>], iteration_bounds = array<i64: 1, 1>, scalar_prefetch = 0 : i64, scratch_operands = 0 : i64, tpu.core_type = #tpu.core_type<tc>, window_params = [{transform_indices = @transform_0, window_bounds = array<i64: 16, 16>}, {transform_indices = @transform_1, window_bounds = array<i64: 128, 16>}, {transform_indices = @transform_2, window_bounds = array<i64: 1, 128>}, {transform_indices = @transform_3, window_bounds = array<i64: 16, 128>}]} {
    %c0 = arith.constant 0 : index
    %c0_0 = arith.constant 0 : index
    %0 = vector.load %arg2[%c0, %c0_0] : memref<16x16xbf16, #tpu.memory_space<vmem>>, vector<16x16xbf16>
    %c0_1 = arith.constant 0 : index
    %c0_2 = arith.constant 0 : index
    %1 = vector.load %arg3[%c0_1, %c0_2] : memref<128x16xbf16, #tpu.memory_space<vmem>>, vector<128x16xbf16>
    %c0_3 = arith.constant 0 : index
    %c0_4 = arith.constant 0 : index
    %2 = vector.load %arg4[%c0_3, %c0_4] : memref<1x128xf32, #tpu.memory_space<vmem>>, vector<1x128xf32>
    %cst = arith.constant dense<0.000000e+00> : vector<16x128xf32>
    %3 = tpu.matmul %0, %1, %cst {dimension_numbers = #tpu.dot_dimension_numbers<[1], [1], [0], [0], [0, 0, 1, 0], [], []>} : vector<16x16xbf16>, vector<128x16xbf16>, vector<16x128xf32> -> vector<16x128xf32>
    %4 = vector.broadcast %2 : vector<1x128xf32> to vector<16x128xf32>
    %5 = arith.addf %3, %4 : vector<16x128xf32>
    %6 = math.absf %5 : vector<16x128xf32>
    %cst_5 = arith.constant 1.000000e+00 : f32
    %7 = vector.broadcast %cst_5 : f32 to vector<16x128xf32>
    %8 = arith.addf %7, %6 : vector<16x128xf32>
    %9 = tpu.reciprocal %8 {approx = true} : vector<16x128xf32> -> vector<16x128xf32>
    %10 = arith.mulf %5, %9 : vector<16x128xf32>
    %c0_6 = arith.constant 0 : index
    %c0_7 = arith.constant 0 : index
    %11 = vector.load %arg5[%c0_6, %c0_7] : memref<16x128xf32, #tpu.memory_space<vmem>>, vector<16x128xf32>
    tpu.vector_store %arg5[%c0_6, %c0_7], %10 {strides = array<i32>} : memref<16x128xf32, #tpu.memory_space<vmem>>, vector<16x128xf32>,
    return
  }
  func.func @transform_0(%arg0: i32, %arg1: i32) -> (i32, i32) {
    %c0_i32 = arith.constant 0 : i32
    %c0_i32_0 = arith.constant 0 : i32
    return %arg0, %c0_i32 : i32, i32
  }
  func.func @transform_1(%arg0: i32, %arg1: i32) -> (i32, i32) {
    %c0_i32 = arith.constant 0 : i32
    %c0_i32_0 = arith.constant 0 : i32
    return %arg1, %c0_i32 : i32, i32
  }
  func.func @transform_2(%arg0: i32, %arg1: i32) -> (i32, i32) {
    %c0_i32 = arith.constant 0 : i32
    %c0_i32_0 = arith.constant 0 : i32
    return %c0_i32, %arg1 : i32, i32
  }
  func.func @transform_3(%arg0: i32, %arg1: i32) -> (i32, i32) {
    %c0_i32 = arith.constant 0 : i32
    return %arg0, %arg1 : i32, i32
  }
}

</mosaic_0001>

<llo_original>
// kernel: tpu_custom_call.1
$region0: #{tpu_custom_call.1}
  #allocation0 [shape = 'u32[]', space=smem, size = 0x4, offset = 0x4, fixed_abs, tag = 'smem constant byte address 0x4 - core index']
  #allocation1 [shape = 'u32[144,128]{1,0:T(1,128)}', space=vmem, size = 0x12000, scoped, tag = 'internal scratch']
  %s0 = inlined_call_operand.vmem [shape: bf16[16,16], index: 0, kind: input, shape index: {}]
  %s1 = inlined_call_operand.vmem [shape: bf16[128,16], index: 1, kind: input, shape index: {}]
  %s2 = inlined_call_operand.vmem [shape: f32[1,128], index: 2, kind: input, shape index: {}]
  %s3 = inlined_call_operand.hbm [shape: f32[16,128], index: 3, kind: output, shape index: {}]
  %s4 = sld [smem:[#allocation0]]
  $region22: #{tpu_custom_call.1} parent=0
    _
  %s6 = ssub.s32 1, %s4
  %s7 = scalar_select 0, %s6, %s4
  $region1: #{tpu_custom_call.1} parent=0
    #allocation2 [shape = 'u8[8192]{0}', space=vmem, size = 0x2000, scoped, tag = 'output window, operand 0, single buffered']
    #allocation3 [shape = 's32[1]{0}', space=sflag, size = 0x4, scoped, tag = 'scoped memory for tpu_custom_call.1']
    %8 = vsyncpa [#allocation3], 0
    // Predicated region
    $region2: #{tpu_custom_call.1} parent=1 // pred_check
      _
    $region3: #{tpu_custom_call.1} parent=1 // pred_check_branch
      %10 = sbr.rel (0) target = $region5
    $region4: #{tpu_custom_call.1} parent=1 // pred_region
      _
    $region5: #{tpu_custom_call.1} parent=1 // pred_fallthru
      _
    // Predicated region
    $region6: #{tpu_custom_call.1} parent=1 // pred_check
      _
    $region7: #{tpu_custom_call.1} parent=1 // pred_check_branch
      %12 = sbr.rel (0) target = $region9
    $region8: #{tpu_custom_call.1} parent=1 // pred_region
      _
    $region9: #{tpu_custom_call.1} parent=1 // pred_fallthru
      _
    // Predicated region
    $region10: #{tpu_custom_call.1} parent=1 // pred_check
      _
    $region11: #{tpu_custom_call.1} parent=1 // pred_check_branch
      %14 = sbr.rel (0) target = $region13
    $region12: #{tpu_custom_call.1} parent=1 // pred_region
      _
    $region13: #{tpu_custom_call.1} parent=1 // pred_fallthru
      _
    %v16 = vld [vmem:[%s0] sm:$0xf]
    %v17 = vld [vmem:[%s0 + $0x4] sm:$0xf]
    %v18 = vld [vmem:[%s1] sm:$0xf]
    %v19 = vld [vmem:[%s1 + $0x4] sm:$0xf]
    %v20 = vld [vmem:[%s1 + $0x8] sm:$0xf]
    %v21 = vld [vmem:[%s1 + $0xc] sm:$0xf]
    %v22 = vld [vmem:[%s1 + $0x10] sm:$0xf]
    %v23 = vld [vmem:[%s1 + $0x14] sm:$0xf]
    %v24 = vld [vmem:[%s1 + $0x18] sm:$0xf]
    %v25 = vld [vmem:[%s1 + $0x1c] sm:$0xf]
    %v26 = vld [vmem:[%s1 + $0x20] sm:$0xf]
    %v27 = vld [vmem:[%s1 + $0x24] sm:$0xf]
    %v28 = vld [vmem:[%s1 + $0x28] sm:$0xf]
    %v29 = vld [vmem:[%s1 + $0x2c] sm:$0xf]
    %v30 = vld [vmem:[%s1 + $0x30] sm:$0xf]
    %v31 = vld [vmem:[%s1 + $0x34] sm:$0xf]
    %v32 = vld [vmem:[%s1 + $0x38] sm:$0xf]
    %v33 = vld [vmem:[%s1 + $0x3c] sm:$0xf]
    %v34 = vld [vmem:[%s2] sm:$0x1]
    %v36 = vlaneseq
    %v37 = vshrl.u32 %v36, 7
    %v38 = vsub.s32 0, %v37
    %v39 = vrot.slane %v34, %v38
    %v43 = vunpack.c.l.b16 %v16
    %v44 = vunpack.c.l.b16 %v17
    %v45 = vpack.c.b16 %v44, %v43
    %v62 = vunpack.c.l.b16 %v18
    %v63 = vunpack.c.l.b16 %v19
    %v64 = vunpack.c.l.b16 %v20
    %v65 = vunpack.c.l.b16 %v21
    %v66 = vunpack.c.l.b16 %v22
    %v67 = vunpack.c.l.b16 %v23
    %v68 = vunpack.c.l.b16 %v24
    %v69 = vunpack.c.l.b16 %v25
    %v70 = vunpack.c.l.b16 %v26
    %v71 = vunpack.c.l.b16 %v27
    %v72 = vunpack.c.l.b16 %v28
    %v73 = vunpack.c.l.b16 %v29
    %v74 = vunpack.c.l.b16 %v30
    %v75 = vunpack.c.l.b16 %v31
    %v76 = vunpack.c.l.b16 %v32
    %v77 = vunpack.c.l.b16 %v33
    %v78 = vpack.c.b16 %v63, %v62
    %v79 = vpack.c.b16 %v65, %v64
    %v80 = vpack.c.b16 %v67, %v66
    %v81 = vpack.c.b16 %v69, %v68
    %v82 = vpack.c.b16 %v71, %v70
    %v83 = vpack.c.b16 %v73, %v72
    %v84 = vpack.c.b16 %v75, %v74
    %v85 = vpack.c.b16 %v77, %v76
    %vm86 = vcmask 130048
    %v88 = vsel %vm86, %v45, 0
    %v91 = vsel %vm86, %v78, 0
    %v94 = vsel %vm86, %v79, 0
    %v97 = vsel %vm86, %v80, 0
    %v100 = vsel %vm86, %v81, 0
    %v103 = vsel %vm86, %v82, 0
    %v106 = vsel %vm86, %v83, 0
    %v109 = vsel %vm86, %v84, 0
    %v112 = vsel %vm86, %v85, 0
    %114 = vmatprep.subr.bf16.mxu0 0
    %115 = vmatpush1.bf16.xpose.msra.mxu0 %v91
    %116 = vmatprep.subr.bf16.mxu0 0
    %117 = vmatpush1.bf16.xpose.msra.mxu0 %v94
    %118 = vmatprep.subr.bf16.mxu0 0
    %119 = vmatpush1.bf16.xpose.msra.mxu0 %v97
    %120 = vmatprep.subr.bf16.mxu0 0
    %121 = vmatpush1.bf16.xpose.msra.mxu0 %v100
    %122 = vmatprep.subr.bf16.mxu0 0
    %123 = vmatpush1.bf16.xpose.msra.mxu0 %v103
    %124 = vmatprep.subr.bf16.mxu0 0
    %125 = vmatpush1.bf16.xpose.msra.mxu0 %v106
    %126 = vmatprep.subr.bf16.mxu0 0
    %127 = vmatpush1.bf16.xpose.msra.mxu0 %v109
    %128 = vmatprep.subr.bf16.mxu0 0
    %129 = vmatpush1.bf16.xpose.msra.mxu0 %v112
    %130 = vmatprep.subr.bf16.mxu0 0
    %131 = vmatpush1.bf16.xpose.msra.mxu0 0
    %132 = vmatprep.subr.bf16.mxu0 0
    %133 = vmatpush1.bf16.xpose.msra.mxu0 0
    %134 = vmatprep.subr.bf16.mxu0 0
    %135 = vmatpush1.bf16.xpose.msra.mxu0 0
    %136 = vmatprep.subr.bf16.mxu0 0
    %137 = vmatpush1.bf16.xpose.msra.mxu0 0
    %138 = vmatprep.subr.bf16.mxu0 0
    %139 = vmatpush1.bf16.xpose.msra.mxu0 0
    %140 = vmatprep.subr.bf16.mxu0 0
    %141 = vmatpush1.bf16.xpose.msra.mxu0 0
    %142 = vmatprep.subr.bf16.mxu0 0
    %143 = vmatpush1.bf16.xpose.msra.mxu0 0
    %144 = vmatprep.subr.bf16.mxu0 0
    %145 = vmatpush1.bf16.xpose.msra.mxu0 0
    %146 = vmatprep.mubr.bf16.mxu0 0
    %147 = vmatmul.mubr.bf16.gmra.mrb[0].mxu0 %v88
    %v148 = vpop.f32.mrb[0].mxu0
    %v149 = vadd.f32 %v39, %v148
    %v150 = vpop.f32.mrb[0].mxu0
    %v151 = vpop.f32.mrb[0].mxu0
    %v152 = vadd.f32 %v39, %v151
    %v153 = vpop.f32.mrb[0].mxu0
    %154 = vdwg.mxu0
    %v155 = vand.u32 2147483647, %v149
    %v156 = vand.u32 2147483647, %v152
    %v157 = vadd.f32 %v155, 1.0
    %v158 = vadd.f32 %v156, 1.0
    %v159 = vrcp.pop %v157
    %v160 = vrcp.pop %v158
    %v161 = vmul.f32 %v149, %v159
    %v162 = vmul.f32 %v152, %v160
    %163 = vst [vmem:[#allocation2] sm:$0xff] %v161
    %164 = vst [vmem:[#allocation2 + $0x8] sm:$0xff] %v162
    // Predicated region
    $region14: #{tpu_custom_call.1} parent=1 // pred_check
      _
    $region15: #{tpu_custom_call.1} parent=1 // pred_check_branch
      %166 = sbr.rel (0) target = $region17
    $region16: #{tpu_custom_call.1} parent=1 // pred_region
      %s168 = ssub.s32 256, 256
      %169 = vsyncadd [#allocation3], %s168
      %s170 = sshll.u32 [#allocation2], 4
      %s171 = int_to_ptr.vmem [resolvable:$true] %s170
      %176 = dma.vmem_to_hbm [thread:$0]  %s171, 256, %s3, [#allocation3], 128, 128, 8
    $region17: #{tpu_custom_call.1} parent=1 // pred_fallthru
      _
    // Predicated region
    $region18: #{tpu_custom_call.1} parent=1 // pred_check
      _
    $region19: #{tpu_custom_call.1} parent=1 // pred_check_branch
      %178 = sbr.rel (0) target = $region21
    $region20: #{tpu_custom_call.1} parent=1 // pred_region
      %179 = dma.done [#allocation3], 256
    $region21: #{tpu_custom_call.1} parent=1 // pred_fallthru
      _
    %180 = vsyncpa [#allocation3], 1

</llo_original>
